<compile_context>
chip_gen: v7x
topology: tpu7x:2x2x1
jax: 0.10.0
libtpu: 0.0.40
codegen_flags: <defaults>
</compile_context>

<pallas_src>
import math
from functools import partial

import jax
import jax.numpy as jnp
import numpy as np
from jax.experimental import pallas as pl
from jax.experimental.pallas import tpu as pltpu  # noqa: F401  (TPU backend)

# ----- small shapes consistent with the module -----
D_MODEL = 32
N_HEADS = 4
D_HEAD = D_MODEL // N_HEADS
BATCH = 2
SEQ = 8
BASE_STD = 0.02


# ---------------- kernel ---------------------------------------------------------------
def _mha_kernel(x_ref, wqkv_ref, wo_ref, bias_ref, o_ref, *, B, T, H, dh):
    """Fused causal multi-head self-attention + output projection (single call).

    x_ref    : (B*T, D)   bf16  activation (pre-flattened / pre-cast in wrapper)
    wqkv_ref : (D, 3*D)   bf16  [Wq*scale | Wk | Wv]
    wo_ref   : (D, D)     bf16  unsplit c_proj weight
    bias_ref : (T, T)     f32   additive causal bias (0 / -1e30)
    o_ref    : (B*T, D)   f32
    """
    D = H * dh

    # ---- single fused QKV projection: one MXU matmul, f32 accumulate ------------------
    qkv = jnp.dot(x_ref[...], wqkv_ref[...],
                  preferred_element_type=jnp.float32)                    # (BT, 3D)

    # ---- move heads into the leading (batch) dim: (H*B, T, dh) ------------------------
    # Leading-axis concats are plain vreg copies (no risky 4-D transpose) and let the
    # scores / softmax / AV run once over all B*H heads.
    def split_heads(off):
        return jnp.concatenate(
            [qkv[:, off + h * dh: off + (h + 1) * dh].reshape(B, T, dh)
             for h in range(H)], axis=0).astype(jnp.bfloat16)            # (H*B, T, dh)

    q = split_heads(0)            # 1/sqrt(dh) already folded into the Wq columns
    k = split_heads(D)
    v = split_heads(2 * D)

    # ---- attention, batched over all B*H heads at once --------------------------------
    s = jnp.einsum("btd,bsd->bts", q, k,
                   preferred_element_type=jnp.float32) + bias_ref[...]   # (HB, T, T) f32
    s = s - jnp.max(s, axis=-1, keepdims=True)
    p = jnp.exp(s)
    p = p * pl.reciprocal(jnp.sum(p, axis=-1, keepdims=True), approx=True)

    att = jnp.einsum("bts,bsd->btd", p.astype(jnp.bfloat16), v,
                     preferred_element_type=jnp.float32)                 # (HB, T, dh)

    # ---- merge heads to contiguous (BT, H*dh) and one unsplit output projection -------
    att_flat = jnp.concatenate(
        [att[h * B:(h + 1) * B].reshape(B * T, dh) for h in range(H)],
        axis=-1).astype(jnp.bfloat16)                                    # (BT, D)
    o_ref[...] = jnp.dot(att_flat, wo_ref[...],
                         preferred_element_type=jnp.float32)             # (BT, D)


# ---------------- wrapper --------------------------------------------------------------
@jax.jit
def self_attention_mha(x, wq, wk, wv, wo):
    """y = c_proj(causal_MHA(x)). Weights stored (in_features, out_features): y = x @ W."""
    B, T, D = x.shape
    H, dh = N_HEADS, D_HEAD
    scale = 1.0 / math.sqrt(dh)

    # Wrapper-side (free XLA) prep: fused QKV weight with scale folded into Wq,
    # bf16 casts (halve DMA bytes), pre-flattened bf16 activation, causal bias.
    wqkv = jnp.concatenate([wq * scale, wk, wv], axis=1).astype(jnp.bfloat16)  # (D, 3D)
    wo_b = wo.astype(jnp.bfloat16)                                             # (D, D)
    x_flat = x.reshape(B * T, D).astype(jnp.bfloat16)                          # (BT, D)

    causal = jnp.tril(jnp.ones((T, T), dtype=bool))
    bias = jnp.where(causal, 0.0, -1e30).astype(jnp.float32)   # finite: scores stay f32

    kern = partial(_mha_kernel, B=B, T=T, H=H, dh=dh)

    # Single fused, grid-less pallas_call: whole activation + weights resident in VMEM.
    # TODO(synk): at realistic B/T switch to a flash-style KV-block grid axis
    # ('arbitrary') + a 'parallel' batch/head axis so v7x's two TensorCores are used and
    # its 64 MiB VMEM budget is respected; grid-less is optimal at this toy size.
    y = pl.pallas_call(
        kern,
        out_shape=jax.ShapeDtypeStruct((B * T, D), jnp.float32),
    )(x_flat, wqkv, wo_b, bias)

    # TODO(synk): kv-cache / rope / GQA (kv_rep>1) decode paths are not exercised under
    # the default config (pos_emb='absolute', n_kv_heads=n_heads, cache=None) and are omitted.
    return y.reshape(B, T, D), None   # (y, cache), mirroring the torch module


# ---------------- pure-JAX reference (f32) ----------------------------------------------
def ref_forward(x, wq, wk, wv, wo):
    B, T, D = x.shape
    H, dh = N_HEADS, D_HEAD
    q = (x @ wq).reshape(B, T, H, dh).transpose(0, 2, 1, 3)
    k = (x @ wk).reshape(B, T, H, dh).transpose(0, 2, 1, 3)
    v = (x @ wv).reshape(B, T, H, dh).transpose(0, 2, 1, 3)
    s = jnp.einsum("bhqd,bhkd->bhqk", q, k) / math.sqrt(dh)
    mask = jnp.tril(jnp.ones((T, T), dtype=bool))
    s = jnp.where(mask, s, -jnp.inf)
    p = jax.nn.softmax(s, axis=-1)
    att = jnp.einsum("bhqk,bhkd->bhqd", p, v).transpose(0, 2, 1, 3).reshape(B, T, D)
    return att @ wo


# ---------------- main -------------------------------------------------------------------
if __name__ == "__main__":
    key = jax.random.PRNGKey(0)
    kx, kq, kk, kv, ko = jax.random.split(key, 5)
    x = jax.random.normal(kx, (BATCH, SEQ, D_MODEL), jnp.float32)
    wq = (BASE_STD * jax.random.normal(kq, (D_MODEL, D_MODEL))).astype(jnp.float32)
    wk = (BASE_STD * jax.random.normal(kk, (D_MODEL, D_MODEL))).astype(jnp.float32)
    wv = (BASE_STD * jax.random.normal(kv, (D_MODEL, D_MODEL))).astype(jnp.float32)
    wo = (BASE_STD * jax.random.normal(ko, (D_MODEL, D_MODEL))).astype(jnp.float32)

    y, _cache = self_attention_mha(x, wq, wk, wv, wo)
    y = jax.block_until_ready(y)

    ref = jax.block_until_ready(ref_forward(x, wq, wk, wv, wo))
    # bf16 MXU operands + approx softmax reciprocal -> ~1e-3 relative error vs f32 torch ref.
    np.testing.assert_allclose(np.asarray(y), np.asarray(ref), rtol=2e-3, atol=2e-3)

    print("KERNEL_OK")
</pallas_src>

<mosaic_0001>
module attributes {stable_mosaic.version = 11 : i64} {
  func.func @_mha_kernel(%arg0: memref<16x32xbf16, #tpu.memory_space<vmem>>, %arg1: memref<32x96xbf16, #tpu.memory_space<vmem>>, %arg2: memref<32x32xbf16, #tpu.memory_space<vmem>>, %arg3: memref<8x8xf32, #tpu.memory_space<vmem>>, %arg4: memref<16x32xf32, #tpu.memory_space<vmem>>) attributes {dimension_semantics = [], scalar_prefetch = 0 : i64, scratch_operands = 0 : i64, tpu.core_type = #tpu.core_type<tc>} {
    %c0 = arith.constant 0 : index
    %c0_0 = arith.constant 0 : index
    %0 = vector.load %arg0[%c0, %c0_0] : memref<16x32xbf16, #tpu.memory_space<vmem>>, vector<16x32xbf16>
    %c0_1 = arith.constant 0 : index
    %c0_2 = arith.constant 0 : index
    %1 = vector.load %arg1[%c0_1, %c0_2] : memref<32x96xbf16, #tpu.memory_space<vmem>>, vector<32x96xbf16>
    %cst = arith.constant dense<0.000000e+00> : vector<16x96xf32>
    %2 = tpu.matmul %0, %1, %cst {dimension_numbers = #tpu.dot_dimension_numbers<[1], [0], [0], [1], [0, 0, 1, 1], [], []>} : vector<16x32xbf16>, vector<32x96xbf16>, vector<16x96xf32> -> vector<16x96xf32>
    %3 = vector.extract_strided_slice %2 {offsets = [0, 0], sizes = [16, 8], strides = [1, 1]} : vector<16x96xf32> to vector<16x8xf32>
    %4 = vector.shape_cast %3 : vector<16x8xf32> to vector<2x8x8xf32>
    %5 = vector.extract_strided_slice %2 {offsets = [0, 8], sizes = [16, 8], strides = [1, 1]} : vector<16x96xf32> to vector<16x8xf32>
    %6 = vector.shape_cast %5 : vector<16x8xf32> to vector<2x8x8xf32>
    %7 = vector.extract_strided_slice %2 {offsets = [0, 16], sizes = [16, 8], strides = [1, 1]} : vector<16x96xf32> to vector<16x8xf32>
    %8 = vector.shape_cast %7 : vector<16x8xf32> to vector<2x8x8xf32>
    %9 = vector.extract_strided_slice %2 {offsets = [0, 24], sizes = [16, 8], strides = [1, 1]} : vector<16x96xf32> to vector<16x8xf32>
    %10 = vector.shape_cast %9 : vector<16x8xf32> to vector<2x8x8xf32>
    %11 = tpu.concatenate %4, %6, %8, %10 in 0 : vector<2x8x8xf32>, vector<2x8x8xf32>, vector<2x8x8xf32>, vector<2x8x8xf32> -> vector<8x8x8xf32>
    %12 = arith.truncf %11 : vector<8x8x8xf32> to vector<8x8x8xbf16>
    %13 = vector.extract_strided_slice %2 {offsets = [0, 32], sizes = [16, 8], strides = [1, 1]} : vector<16x96xf32> to vector<16x8xf32>
    %14 = vector.shape_cast %13 : vector<16x8xf32> to vector<2x8x8xf32>
    %15 = vector.extract_strided_slice %2 {offsets = [0, 40], sizes = [16, 8], strides = [1, 1]} : vector<16x96xf32> to vector<16x8xf32>
    %16 = vector.shape_cast %15 : vector<16x8xf32> to vector<2x8x8xf32>
    %17 = vector.extract_strided_slice %2 {offsets = [0, 48], sizes = [16, 8], strides = [1, 1]} : vector<16x96xf32> to vector<16x8xf32>
    %18 = vector.shape_cast %17 : vector<16x8xf32> to vector<2x8x8xf32>
    %19 = vector.extract_strided_slice %2 {offsets = [0, 56], sizes = [16, 8], strides = [1, 1]} : vector<16x96xf32> to vector<16x8xf32>
    %20 = vector.shape_cast %19 : vector<16x8xf32> to vector<2x8x8xf32>
    %21 = tpu.concatenate %14, %16, %18, %20 in 0 : vector<2x8x8xf32>, vector<2x8x8xf32>, vector<2x8x8xf32>, vector<2x8x8xf32> -> vector<8x8x8xf32>
    %22 = arith.truncf %21 : vector<8x8x8xf32> to vector<8x8x8xbf16>
    %23 = vector.extract_strided_slice %2 {offsets = [0, 64], sizes = [16, 8], strides = [1, 1]} : vector<16x96xf32> to vector<16x8xf32>
    %24 = vector.shape_cast %23 : vector<16x8xf32> to vector<2x8x8xf32>
    %25 = vector.extract_strided_slice %2 {offsets = [0, 72], sizes = [16, 8], strides = [1, 1]} : vector<16x96xf32> to vector<16x8xf32>
    %26 = vector.shape_cast %25 : vector<16x8xf32> to vector<2x8x8xf32>
    %27 = vector.extract_strided_slice %2 {offsets = [0, 80], sizes = [16, 8], strides = [1, 1]} : vector<16x96xf32> to vector<16x8xf32>
    %28 = vector.shape_cast %27 : vector<16x8xf32> to vector<2x8x8xf32>
    %29 = vector.extract_strided_slice %2 {offsets = [0, 88], sizes = [16, 8], strides = [1, 1]} : vector<16x96xf32> to vector<16x8xf32>
    %30 = vector.shape_cast %29 : vector<16x8xf32> to vector<2x8x8xf32>
    %31 = tpu.concatenate %24, %26, %28, %30 in 0 : vector<2x8x8xf32>, vector<2x8x8xf32>, vector<2x8x8xf32>, vector<2x8x8xf32> -> vector<8x8x8xf32>
    %32 = arith.truncf %31 : vector<8x8x8xf32> to vector<8x8x8xbf16>
    "tpu.trace_start"() <{level = 10 : i32, message = "btd,bsd->bts"}> : () -> ()
    %cst_3 = arith.constant dense<0.000000e+00> : vector<8x8x8xf32>
    %33 = tpu.matmul %12, %22, %cst_3 {dimension_numbers = #tpu.dot_dimension_numbers<[2], [2], [1], [1], [0, 0, 0, 1, 1, 1], [0], [0]>} : vector<8x8x8xbf16>, vector<8x8x8xbf16>, vector<8x8x8xf32> -> vector<8x8x8xf32>
    "tpu.trace_stop"() : () -> ()
    %c0_4 = arith.constant 0 : index
    %c0_5 = arith.constant 0 : index
    %34 = vector.load %arg3[%c0_4, %c0_5] : memref<8x8xf32, #tpu.memory_space<vmem>>, vector<8x8xf32>
    %35 = vector.shape_cast %34 : vector<8x8xf32> to vector<1x8x8xf32>
    %36 = vector.broadcast %35 : vector<1x8x8xf32> to vector<8x8x8xf32>
    %37 = arith.addf %33, %36 : vector<8x8x8xf32>
    %cst_6 = arith.constant dense<0xFF800000> : vector<8x8xf32>
    %38 = vector.multi_reduction <maximumf>, %37, %cst_6 [2] : vector<8x8x8xf32> to vector<8x8xf32>
    %39 = vector.shape_cast %38 : vector<8x8xf32> to vector<8x8x1xf32>
    %40 = vector.broadcast %39 : vector<8x8x1xf32> to vector<8x8x8xf32>
    %41 = arith.subf %37, %40 : vector<8x8x8xf32>
    %42 = math.exp %41 : vector<8x8x8xf32>
    %cst_7 = arith.constant dense<0.000000e+00> : vector<8x8xf32>
    %43 = vector.multi_reduction <add>, %42, %cst_7 [2] : vector<8x8x8xf32> to vector<8x8xf32>
    %44 = vector.shape_cast %43 : vector<8x8xf32> to vector<8x8x1xf32>
    %45 = tpu.reciprocal %44 {approx = true} : vector<8x8x1xf32> -> vector<8x8x1xf32>
    %46 = vector.broadcast %45 : vector<8x8x1xf32> to vector<8x8x8xf32>
    %47 = arith.mulf %42, %46 : vector<8x8x8xf32>
    %48 = arith.truncf %47 : vector<8x8x8xf32> to vector<8x8x8xbf16>
    "tpu.trace_start"() <{level = 10 : i32, message = "bts,bsd->btd"}> : () -> ()
    %cst_8 = arith.constant dense<0.000000e+00> : vector<8x8x8xf32>
    %49 = tpu.matmul %48, %32, %cst_8 {dimension_numbers = #tpu.dot_dimension_numbers<[2], [1], [1], [2], [0, 0, 0, 1, 1, 2], [0], [0]>} : vector<8x8x8xbf16>, vector<8x8x8xbf16>, vector<8x8x8xf32> -> vector<8x8x8xf32>
    "tpu.trace_stop"() : () -> ()
    %50 = vector.extract_strided_slice %49 {offsets = [0, 0, 0], sizes = [2, 8, 8], strides = [1, 1, 1]} : vector<8x8x8xf32> to vector<2x8x8xf32>
    %51 = vector.shape_cast %50 : vector<2x8x8xf32> to vector<16x8xf32>
    %52 = vector.extract_strided_slice %49 {offsets = [2, 0, 0], sizes = [2, 8, 8], strides = [1, 1, 1]} : vector<8x8x8xf32> to vector<2x8x8xf32>
    %53 = vector.shape_cast %52 : vector<2x8x8xf32> to vector<16x8xf32>
    %54 = vector.extract_strided_slice %49 {offsets = [4, 0, 0], sizes = [2, 8, 8], strides = [1, 1, 1]} : vector<8x8x8xf32> to vector<2x8x8xf32>
    %55 = vector.shape_cast %54 : vector<2x8x8xf32> to vector<16x8xf32>
    %56 = vector.extract_strided_slice %49 {offsets = [6, 0, 0], sizes = [2, 8, 8], strides = [1, 1, 1]} : vector<8x8x8xf32> to vector<2x8x8xf32>
    %57 = vector.shape_cast %56 : vector<2x8x8xf32> to vector<16x8xf32>
    %58 = tpu.concatenate %51, %53, %55, %57 in 1 : vector<16x8xf32>, vector<16x8xf32>, vector<16x8xf32>, vector<16x8xf32> -> vector<16x32xf32>
    %59 = arith.truncf %58 : vector<16x32xf32> to vector<16x32xbf16>
    %c0_9 = arith.constant 0 : index
    %c0_10 = arith.constant 0 : index
    %60 = vector.load %arg2[%c0_9, %c0_10] : memref<32x32xbf16, #tpu.memory_space<vmem>>, vector<32x32xbf16>
    %cst_11 = arith.constant dense<0.000000e+00> : vector<16x32xf32>
    %61 = tpu.matmul %59, %60, %cst_11 {dimension_numbers = #tpu.dot_dimension_numbers<[1], [0], [0], [1], [0, 0, 1, 1], [], []>} : vector<16x32xbf16>, vector<32x32xbf16>, vector<16x32xf32> -> vector<16x32xf32>
    %c0_12 = arith.constant 0 : index
    %c0_13 = arith.constant 0 : index
    %62 = vector.load %arg4[%c0_12, %c0_13] : memref<16x32xf32, #tpu.memory_space<vmem>>, vector<16x32xf32>
    tpu.vector_store %arg4[%c0_12, %c0_13], %61 {strides = array<i32>} : memref<16x32xf32, #tpu.memory_space<vmem>>, vector<16x32xf32>,
    return
  }
}

</mosaic_0001>

<llo_original>
// kernel: self_attention_mha.1
$region0: #{self_attention_mha.1}
  #allocation0 [shape = 'u32[]', space=smem, size = 0x4, offset = 0x4, fixed_abs, tag = 'smem constant byte address 0x4 - core index']
  #allocation1 [shape = 'u32[144,128]{1,0:T(1,128)}', space=vmem, size = 0x12000, scoped, tag = 'internal scratch']
  %s0 = inlined_call_operand.vmem [shape: bf16[16,32], index: 0, kind: input, shape index: {}]
  %s1 = inlined_call_operand.vmem [shape: bf16[32,96], index: 1, kind: input, shape index: {}]
  %s2 = inlined_call_operand.vmem [shape: bf16[32,32], index: 2, kind: input, shape index: {}]
  %s3 = inlined_call_operand.vmem [shape: f32[8,8], index: 3, kind: input, shape index: {}]
  %s4 = inlined_call_operand.hbm [shape: f32[16,32], index: 4, kind: output, shape index: {}]
  %s5 = sld [smem:[#allocation0]]
  $region26: #{self_attention_mha.1} parent=0
    _
  %s7 = ssub.s32 1, %s5
  %s8 = scalar_select 0, %s7, %s5
  $region1: #{self_attention_mha.1} parent=0
    #allocation2 [shape = 'u8[8192]{0}', space=vmem, size = 0x2000, scoped, tag = 'output window, operand 0, single buffered']
    #allocation3 [shape = 's32[1]{0}', space=sflag, size = 0x4, scoped, tag = 'scoped memory for self_attention_mha.1']
    %9 = vsyncpa [#allocation3], 0
    // Predicated region
    $region2: #{self_attention_mha.1} parent=1 // pred_check
      _
    $region3: #{self_attention_mha.1} parent=1 // pred_check_branch
      %11 = sbr.rel (0) target = $region5
    $region4: #{self_attention_mha.1} parent=1 // pred_region
      _
    $region5: #{self_attention_mha.1} parent=1 // pred_fallthru
      _
    // Predicated region
    $region6: #{self_attention_mha.1} parent=1 // pred_check
      _
    $region7: #{self_attention_mha.1} parent=1 // pred_check_branch
      %13 = sbr.rel (0) target = $region9
    $region8: #{self_attention_mha.1} parent=1 // pred_region
      _
    $region9: #{self_attention_mha.1} parent=1 // pred_fallthru
      _
    // Predicated region
    $region10: #{self_attention_mha.1} parent=1 // pred_check
      _
    $region11: #{self_attention_mha.1} parent=1 // pred_check_branch
      %15 = sbr.rel (0) target = $region13
    $region12: #{self_attention_mha.1} parent=1 // pred_region
      _
    $region13: #{self_attention_mha.1} parent=1 // pred_fallthru
      _
    // Predicated region
    $region14: #{self_attention_mha.1} parent=1 // pred_check
      _
    $region15: #{self_attention_mha.1} parent=1 // pred_check_branch
      %17 = sbr.rel (0) target = $region17
    $region16: #{self_attention_mha.1} parent=1 // pred_region
      _
    $region17: #{self_attention_mha.1} parent=1 // pred_fallthru
      _
    %v19 = vld [vmem:[%s0] sm:$0xf]
    %v20 = vld [vmem:[%s0 + $0x4] sm:$0xf]
    %v21 = vld [vmem:[%s1] sm:$0xf]
    %v22 = vld [vmem:[%s1 + $0x4] sm:$0xf]
    %v23 = vld [vmem:[%s1 + $0x8] sm:$0xf]
    %v24 = vld [vmem:[%s1 + $0xc] sm:$0xf]
    %v27 = vunpack.c.l.b16 %v19
    %v28 = vunpack.c.l.b16 %v20
    %v29 = vpack.c.b16 %v28, %v27
    %v34 = vunpack.c.l.b16 %v21
    %v35 = vunpack.c.l.b16 %v22
    %v36 = vunpack.c.l.b16 %v23
    %v37 = vunpack.c.l.b16 %v24
    %v38 = vpack.c.b16 %v35, %v34
    %v39 = vpack.c.b16 %v37, %v36
    %vm42 = vcmask 261120
    %v44 = vsel %vm42, %v29, 0
    %46 = vmatprep.subr.bf16.mxu0 0
    %47 = vmatpush1.bf16.msra.mxu0 %v38
    %48 = vmatprep.subr.bf16.mxu0 0
    %49 = vmatpush1.bf16.msra.mxu0 %v39
    %50 = vmatprep.subr.bf16.mxu0 0
    %51 = vmatpush1.bf16.msra.mxu0 0
    %52 = vmatprep.subr.bf16.mxu0 0
    %53 = vmatpush1.bf16.msra.mxu0 0
    %54 = vmatprep.subr.bf16.mxu0 0
    %55 = vmatpush1.bf16.msra.mxu0 0
    %56 = vmatprep.subr.bf16.mxu0 0
    %57 = vmatpush1.bf16.msra.mxu0 0
    %58 = vmatprep.subr.bf16.mxu0 0
    %59 = vmatpush1.bf16.msra.mxu0 0
    %60 = vmatprep.subr.bf16.mxu0 0
    %61 = vmatpush1.bf16.msra.mxu0 0
    %62 = vmatprep.subr.bf16.mxu0 0
    %63 = vmatpush1.bf16.msra.mxu0 0
    %64 = vmatprep.subr.bf16.mxu0 0
    %65 = vmatpush1.bf16.msra.mxu0 0
    %66 = vmatprep.subr.bf16.mxu0 0
    %67 = vmatpush1.bf16.msra.mxu0 0
    %68 = vmatprep.subr.bf16.mxu0 0
    %69 = vmatpush1.bf16.msra.mxu0 0
    %70 = vmatprep.subr.bf16.mxu0 0
    %71 = vmatpush1.bf16.msra.mxu0 0
    %72 = vmatprep.subr.bf16.mxu0 0
    %73 = vmatpush1.bf16.msra.mxu0 0
    %74 = vmatprep.subr.bf16.mxu0 0
    %75 = vmatpush1.bf16.msra.mxu0 0
    %76 = vmatprep.subr.bf16.mxu0 0
    %77 = vmatpush1.bf16.msra.mxu0 0
    %78 = vmatprep.mubr.bf16.mxu0 0
    %79 = vmatmul.mubr.bf16.gmra.mrb[0].mxu0 %v44
    %v80 = vpop.f32.mrb[0].mxu0
    %v81 = vadd.f32 0.0, %v80
    %v82 = vpop.f32.mrb[0].mxu0
    %v83 = vpop.f32.mrb[0].mxu0
    %v84 = vadd.f32 0.0, %v83
    %v85 = vpop.f32.mrb[0].mxu0
    %86 = vdwg.mxu0
    %89 = vrot.lane.b32.xlu0 %v81, 120
    %v90 = vpop.permute.xlu0 %89
    %91 = vrot.lane.b32.xlu0 %v84, 120
    %v92 = vpop.permute.xlu0 %91
    %95 = vrot.lane.b32.xlu0 %v81, 112
    %v96 = vpop.permute.xlu0 %95
    %97 = vrot.lane.b32.xlu0 %v84, 112
    %v98 = vpop.permute.xlu0 %97
    %101 = vrot.lane.b32.xlu0 %v81, 104
    %v102 = vpop.permute.xlu0 %101
    %103 = vrot.lane.b32.xlu0 %v84, 104
    %v104 = vpop.permute.xlu0 %103
    %v107 = vpack.c.bf16 %v81, %v81
    %v108 = vpack.c.bf16 %v84, %v84
    %v109 = vpack.c.bf16 %v90, %v90
    %v110 = vpack.c.bf16 %v92, %v92
    %v111 = vpack.c.bf16 %v96, %v96
    %v112 = vpack.c.bf16 %v98, %v98
    %v113 = vpack.c.bf16 %v102, %v102
    %v114 = vpack.c.bf16 %v104, %v104
    %v115 = vld [vmem:[%s3] sm:$0xff]
    %117 = vrot.lane.b32.xlu0 %v107, 96
    %v118 = vpop.permute.xlu0 %117
    %vm119 = vcmask 64512
    %v121 = vsel %vm119, %v107, 0
    %v124 = vsel %vm119, %v118, 0
    %126 = vmatprep.subr.bf16.mxu0 0
    %127 = vmatpush1.bf16.xpose.msra.mxu0 %v124
    %128 = vmatprep.subr.bf16.mxu0 0
    %129 = vmatpush1.bf16.xpose.msra.mxu0 0
    %130 = vmatprep.subr.bf16.mxu0 0
    %131 = vmatpush1.bf16.xpose.msra.mxu0 0
    %132 = vmatprep.subr.bf16.mxu0 0
    %133 = vmatpush1.bf16.xpose.msra.mxu0 0
    %134 = vmatprep.subr.bf16.mxu0 0
    %135 = vmatpush1.bf16.xpose.msra.mxu0 0
    %136 = vmatprep.subr.bf16.mxu0 0
    %137 = vmatpush1.bf16.xpose.msra.mxu0 0
    %138 = vmatprep.subr.bf16.mxu0 0
    %139 = vmatpush1.bf16.xpose.msra.mxu0 0
    %140 = vmatprep.subr.bf16.mxu0 0
    %141 = vmatpush1.bf16.xpose.msra.mxu0 0
    %142 = vmatprep.subr.bf16.mxu0 0
    %143 = vmatpush1.bf16.xpose.msra.mxu0 0
    %144 = vmatprep.subr.bf16.mxu0 0
    %145 = vmatpush1.bf16.xpose.msra.mxu0 0
    %146 = vmatprep.subr.bf16.mxu0 0
    %147 = vmatpush1.bf16.xpose.msra.mxu0 0
    %148 = vmatprep.subr.bf16.mxu0 0
    %149 = vmatpush1.bf16.xpose.msra.mxu0 0
    %150 = vmatprep.subr.bf16.mxu0 0
    %151 = vmatpush1.bf16.xpose.msra.mxu0 0
    %152 = vmatprep.subr.bf16.mxu0 0
    %153 = vmatpush1.bf16.xpose.msra.mxu0 0
    %154 = vmatprep.subr.bf16.mxu0 0
    %155 = vmatpush1.bf16.xpose.msra.mxu0 0
    %156 = vmatprep.subr.bf16.mxu0 0
    %157 = vmatpush1.bf16.xpose.msra.mxu0 0
    %158 = vmatprep.mubr.bf16.mxu0 0
    %159 = vmatmul.mubr.bf16.gmra.mrb[0].mxu0 %v121
    %v160 = vpop.f32.mrb[0].mxu0
    %v161 = vadd.f32 %v115, %v160
    %v162 = vpop.f32.mrb[0].mxu0
    %v163 = vpop.f32.mrb[0].mxu0
    %v164 = vpop.f32.mrb[0].mxu0
    %165 = vdwg.mxu0
    %167 = vrot.lane.b32.xlu0 %v108, 96
    %v168 = vpop.permute.xlu0 %167
    %v170 = vsel %vm119, %v108, 0
    %v173 = vsel %vm119, %v168, 0
    %175 = vmatprep.subr.bf16.mxu0 0
    %176 = vmatpush1.bf16.xpose.msra.mxu0 %v173
    %177 = vmatprep.subr.bf16.mxu0 0
    %178 = vmatpush1.bf16.xpose.msra.mxu0 0
    %179 = vmatprep.subr.bf16.mxu0 0
    %180 = vmatpush1.bf16.xpose.msra.mxu0 0
    %181 = vmatprep.subr.bf16.mxu0 0
    %182 = vmatpush1.bf16.xpose.msra.mxu0 0
    %183 = vmatprep.subr.bf16.mxu0 0
    %184 = vmatpush1.bf16.xpose.msra.mxu0 0
    %185 = vmatprep.subr.bf16.mxu0 0
    %186 = vmatpush1.bf16.xpose.msra.mxu0 0
    %187 = vmatprep.subr.bf16.mxu0 0
    %188 = vmatpush1.bf16.xpose.msra.mxu0 0
    %189 = vmatprep.subr.bf16.mxu0 0
    %190 = vmatpush1.bf16.xpose.msra.mxu0 0
    %191 = vmatprep.subr.bf16.mxu0 0
    %192 = vmatpush1.bf16.xpose.msra.mxu0 0
    %193 = vmatprep.subr.bf16.mxu0 0
    %194 = vmatpush1.bf16.xpose.msra.mxu0 0
    %195 = vmatprep.subr.bf16.mxu0 0
    %196 = vmatpush1.bf16.xpose.msra.mxu0 0
    %197 = vmatprep.subr.bf16.mxu0 0
    %198 = vmatpush1.bf16.xpose.msra.mxu0 0
    %199 = vmatprep.subr.bf16.mxu0 0
    %200 = vmatpush1.bf16.xpose.msra.mxu0 0
    %201 = vmatprep.subr.bf16.mxu0 0
    %202 = vmatpush1.bf16.xpose.msra.mxu0 0
    %203 = vmatprep.subr.bf16.mxu0 0
    %204 = vmatpush1.bf16.xpose.msra.mxu0 0
    %205 = vmatprep.subr.bf16.mxu0 0
    %206 = vmatpush1.bf16.xpose.msra.mxu0 0
    %207 = vmatprep.mubr.bf16.mxu0 0
    %208 = vmatmul.mubr.bf16.gmra.mrb[0].mxu0 %v170
    %v209 = vpop.f32.mrb[0].mxu0
    %v210 = vadd.f32 %v115, %v209
    %v211 = vpop.f32.mrb[0].mxu0
    %v212 = vpop.f32.mrb[0].mxu0
    %v213 = vpop.f32.mrb[0].mxu0
    %214 = vdwg.mxu0
    %216 = vrot.lane.b32.xlu0 %v109, 96
    %v217 = vpop.permute.xlu0 %216
    %v219 = vsel %vm119, %v109, 0
    %v222 = vsel %vm119, %v217, 0
    %224 = vmatprep.subr.bf16.mxu0 0
    %225 = vmatpush1.bf16.xpose.msra.mxu0 %v222
    %226 = vmatprep.subr.bf16.mxu0 0
    %227 = vmatpush1.bf16.xpose.msra.mxu0 0
    %228 = vmatprep.subr.bf16.mxu0 0
    %229 = vmatpush1.bf16.xpose.msra.mxu0 0
    %230 = vmatprep.subr.bf16.mxu0 0
    %231 = vmatpush1.bf16.xpose.msra.mxu0 0
    %232 = vmatprep.subr.bf16.mxu0 0
    %233 = vmatpush1.bf16.xpose.msra.mxu0 0
    %234 = vmatprep.subr.bf16.mxu0 0
    %235 = vmatpush1.bf16.xpose.msra.mxu0 0
    %236 = vmatprep.subr.bf16.mxu0 0
    %237 = vmatpush1.bf16.xpose.msra.mxu0 0
    %238 = vmatprep.subr.bf16.mxu0 0
    %239 = vmatpush1.bf16.xpose.msra.mxu0 0
    %240 = vmatprep.subr.bf16.mxu0 0
    %241 = vmatpush1.bf16.xpose.msra.mxu0 0
    %242 = vmatprep.subr.bf16.mxu0 0
    %243 = vmatpush1.bf16.xpose.msra.mxu0 0
    %244 = vmatprep.subr.bf16.mxu0 0
    %245 = vmatpush1.bf16.xpose.msra.mxu0 0
    %246 = vmatprep.subr.bf16.mxu0 0
    %247 = vmatpush1.bf16.xpose.msra.mxu0 0
    %248 = vmatprep.subr.bf16.mxu0 0
    %249 = vmatpush1.bf16.xpose.msra.mxu0 0
    %250 = vmatprep.subr.bf16.mxu0 0
    %251 = vmatpush1.bf16.xpose.msra.mxu0 0
    %252 = vmatprep.subr.bf16.mxu0 0
    %253 = vmatpush1.bf16.xpose.msra.mxu0 0
    %254 = vmatprep.subr.bf16.mxu0 0
    %255 = vmatpush1.bf16.xpose.msra.mxu0 0
    %256 = vmatprep.mubr.bf16.mxu0 0
    %257 = vmatmul.mubr.bf16.gmra.mrb[0].mxu0 %v219
    %v258 = vpop.f32.mrb[0].mxu0
    %v259 = vadd.f32 %v115, %v258
    %v260 = vpop.f32.mrb[0].mxu0
    %v261 = vpop.f32.mrb[0].mxu0
    %v262 = vpop.f32.mrb[0].mxu0
    %263 = vdwg.mxu0
    %265 = vrot.lane.b32.xlu0 %v110, 96
    %v266 = vpop.permute.xlu0 %265
    %v268 = vsel %vm119, %v110, 0
    %v271 = vsel %vm119, %v266, 0
    %273 = vmatprep.subr.bf16.mxu0 0
    %274 = vmatpush1.bf16.xpose.msra.mxu0 %v271
    %275 = vmatprep.subr.bf16.mxu0 0
    %276 = vmatpush1.bf16.xpose.msra.mxu0 0
    %277 = vmatprep.subr.bf16.mxu0 0
    %278 = vmatpush1.bf16.xpose.msra.mxu0 0
    %279 = vmatprep.subr.bf16.mxu0 0
    %280 = vmatpush1.bf16.xpose.msra.mxu0 0
    %281 = vmatprep.subr.bf16.mxu0 0
    %282 = vmatpush1.bf16.xpose.msra.mxu0 0
    %283 = vmatprep.subr.bf16.mxu0 0
    %284 = vmatpush1.bf16.xpose.msra.mxu0 0
    %285 = vmatprep.subr.bf16.mxu0 0
    %286 = vmatpush1.bf16.xpose.msra.mxu0 0
    %287 = vmatprep.subr.bf16.mxu0 0
    %288 = vmatpush1.bf16.xpose.msra.mxu0 0
    %289 = vmatprep.subr.bf16.mxu0 0
    %290 = vmatpush1.bf16.xpose.msra.mxu0 0
    %291 = vmatprep.subr.bf16.mxu0 0
    %292 = vmatpush1.bf16.xpose.msra.mxu0 0
    %293 = vmatprep.subr.bf16.mxu0 0
    %294 = vmatpush1.bf16.xpose.msra.mxu0 0
    %295 = vmatprep.subr.bf16.mxu0 0
    %296 = vmatpush1.bf16.xpose.msra.mxu0 0
    %297 = vmatprep.subr.bf16.mxu0 0
    %298 = vmatpush1.bf16.xpose.msra.mxu0 0
    %299 = vmatprep.subr.bf16.mxu0 0
    %300 = vmatpush1.bf16.xpose.msra.mxu0 0
    %301 = vmatprep.subr.bf16.mxu0 0
    %302 = vmatpush1.bf16.xpose.msra.mxu0 0
    %303 = vmatprep.subr.bf16.mxu0 0
    %304 = vmatpush1.bf16.xpose.msra.mxu0 0
    %305 = vmatprep.mubr.bf16.mxu0 0
    %306 = vmatmul.mubr.bf16.gmra.mrb[0].mxu0 %v268
    %v307 = vpop.f32.mrb[0].mxu0
    %v308 = vadd.f32 %v115, %v307
    %v309 = vpop.f32.mrb[0].mxu0
    %v310 = vpop.f32.mrb[0].mxu0
    %v311 = vpop.f32.mrb[0].mxu0
    %312 = vdwg.mxu0
    %314 = vrot.lane.b32.xlu0 %v111, 96
    %v315 = vpop.permute.xlu0 %314
    %v317 = vsel %vm119, %v111, 0
    %v320 = vsel %vm119, %v315, 0
    %322 = vmatprep.subr.bf16.mxu0 0
    %323 = vmatpush1.bf16.xpose.msra.mxu0 %v320
    %324 = vmatprep.subr.bf16.mxu0 0
    %325 = vmatpush1.bf16.xpose.msra.mxu0 0
    %326 = vmatprep.subr.bf16.mxu0 0
    %327 = vmatpush1.bf16.xpose.msra.mxu0 0
    %328 = vmatprep.subr.bf16.mxu0 0
    %329 = vmatpush1.bf16.xpose.msra.mxu0 0
    %330 = vmatprep.subr.bf16.mxu0 0
    %331 = vmatpush1.bf16.xpose.msra.mxu0 0
    %332 = vmatprep.subr.bf16.mxu0 0
    %333 = vmatpush1.bf16.xpose.msra.mxu0 0
    %334 = vmatprep.subr.bf16.mxu0 0
    %335 = vmatpush1.bf16.xpose.msra.mxu0 0
    %336 = vmatprep.subr.bf16.mxu0 0
    %337 = vmatpush1.bf16.xpose.msra.mxu0 0
    %338 = vmatprep.subr.bf16.mxu0 0
    %339 = vmatpush1.bf16.xpose.msra.mxu0 0
    %340 = vmatprep.subr.bf16.mxu0 0
    %341 = vmatpush1.bf16.xpose.msra.mxu0 0
    %342 = vmatprep.subr.bf16.mxu0 0
    %343 = vmatpush1.bf16.xpose.msra.mxu0 0
    %344 = vmatprep.subr.bf16.mxu0 0
    %345 = vmatpush1.bf16.xpose.msra.mxu0 0
    %346 = vmatprep.subr.bf16.mxu0 0
    %347 = vmatpush1.bf16.xpose.msra.mxu0 0
    %348 = vmatprep.subr.bf16.mxu0 0
    %349 = vmatpush1.bf16.xpose.msra.mxu0 0
    %350 = vmatprep.subr.bf16.mxu0 0
    %351 = vmatpush1.bf16.xpose.msra.mxu0 0
    %352 = vmatprep.subr.bf16.mxu0 0
    %353 = vmatpush1.bf16.xpose.msra.mxu0 0
    %354 = vmatprep.mubr.bf16.mxu0 0
    %355 = vmatmul.mubr.bf16.gmra.mrb[0].mxu0 %v317
    %v356 = vpop.f32.mrb[0].mxu0
    %v357 = vadd.f32 %v115, %v356
    %v358 = vpop.f32.mrb[0].mxu0
    %v359 = vpop.f32.mrb[0].mxu0
    %v360 = vpop.f32.mrb[0].mxu0
    %361 = vdwg.mxu0
    %363 = vrot.lane.b32.xlu0 %v112, 96
    %v364 = vpop.permute.xlu0 %363
    %v366 = vsel %vm119, %v112, 0
    %v369 = vsel %vm119, %v364, 0
    %371 = vmatprep.subr.bf16.mxu0 0
    %372 = vmatpush1.bf16.xpose.msra.mxu0 %v369
    %373 = vmatprep.subr.bf16.mxu0 0
    %374 = vmatpush1.bf16.xpose.msra.mxu0 0
    %375 = vmatprep.subr.bf16.mxu0 0
    %376 = vmatpush1.bf16.xpose.msra.mxu0 0
    %377 = vmatprep.subr.bf16.mxu0 0
    %378 = vmatpush1.bf16.xpose.msra.mxu0 0
    %379 = vmatprep.subr.bf16.mxu0 0
    %380 = vmatpush1.bf16.xpose.msra.mxu0 0
    %381 = vmatprep.subr.bf16.mxu0 0
    %382 = vmatpush1.bf16.xpose.msra.mxu0 0
    %383 = vmatprep.subr.bf16.mxu0 0
    %384 = vmatpush1.bf16.xpose.msra.mxu0 0
    %385 = vmatprep.subr.bf16.mxu0 0
    %386 = vmatpush1.bf16.xpose.msra.mxu0 0
    %387 = vmatprep.subr.bf16.mxu0 0
    %388 = vmatpush1.bf16.xpose.msra.mxu0 0
    %389 = vmatprep.subr.bf16.mxu0 0
    %390 = vmatpush1.bf16.xpose.msra.mxu0 0
    %391 = vmatprep.subr.bf16.mxu0 0
    %392 = vmatpush1.bf16.xpose.msra.mxu0 0
    %393 = vmatprep.subr.bf16.mxu0 0
    %394 = vmatpush1.bf16.xpose.msra.mxu0 0
    %395 = vmatprep.subr.bf16.mxu0 0
    %396 = vmatpush1.bf16.xpose.msra.mxu0 0
    %397 = vmatprep.subr.bf16.mxu0 0
    %398 = vmatpush1.bf16.xpose.msra.mxu0 0
    %399 = vmatprep.subr.bf16.mxu0 0
    %400 = vmatpush1.bf16.xpose.msra.mxu0 0
    %401 = vmatprep.subr.bf16.mxu0 0
    %402 = vmatpush1.bf16.xpose.msra.mxu0 0
    %403 = vmatprep.mubr.bf16.mxu0 0
    %404 = vmatmul.mubr.bf16.gmra.mrb[0].mxu0 %v366
    %v405 = vpop.f32.mrb[0].mxu0
    %v406 = vadd.f32 %v115, %v405
    %v407 = vpop.f32.mrb[0].mxu0
    %v408 = vpop.f32.mrb[0].mxu0
    %v409 = vpop.f32.mrb[0].mxu0
    %410 = vdwg.mxu0
    %412 = vrot.lane.b32.xlu0 %v113, 96
    %v413 = vpop.permute.xlu0 %412
    %v415 = vsel %vm119, %v113, 0
    %v418 = vsel %vm119, %v413, 0
    %420 = vmatprep.subr.bf16.mxu0 0
    %421 = vmatpush1.bf16.xpose.msra.mxu0 %v418
    %422 = vmatprep.subr.bf16.mxu0 0
    %423 = vmatpush1.bf16.xpose.msra.mxu0 0
    %424 = vmatprep.subr.bf16.mxu0 0
    %425 = vmatpush1.bf16.xpose.msra.mxu0 0
    %426 = vmatprep.subr.bf16.mxu0 0
    %427 = vmatpush1.bf16.xpose.msra.mxu0 0
    %428 = vmatprep.subr.bf16.mxu0 0
    %429 = vmatpush1.bf16.xpose.msra.mxu0 0
    %430 = vmatprep.subr.bf16.mxu0 0
    %431 = vmatpush1.bf16.xpose.msra.mxu0 0
    %432 = vmatprep.subr.bf16.mxu0 0
    %433 = vmatpush1.bf16.xpose.msra.mxu0 0
    %434 = vmatprep.subr.bf16.mxu0 0
    %435 = vmatpush1.bf16.xpose.msra.mxu0 0
    %436 = vmatprep.subr.bf16.mxu0 0
    %437 = vmatpush1.bf16.xpose.msra.mxu0 0
    %438 = vmatprep.subr.bf16.mxu0 0
    %439 = vmatpush1.bf16.xpose.msra.mxu0 0
    %440 = vmatprep.subr.bf16.mxu0 0
    %441 = vmatpush1.bf16.xpose.msra.mxu0 0
    %442 = vmatprep.subr.bf16.mxu0 0
    %443 = vmatpush1.bf16.xpose.msra.mxu0 0
    %444 = vmatprep.subr.bf16.mxu0 0
    %445 = vmatpush1.bf16.xpose.msra.mxu0 0
    %446 = vmatprep.subr.bf16.mxu0 0
    %447 = vmatpush1.bf16.xpose.msra.mxu0 0
    %448 = vmatprep.subr.bf16.mxu0 0
    %449 = vmatpush1.bf16.xpose.msra.mxu0 0
    %450 = vmatprep.subr.bf16.mxu0 0
    %451 = vmatpush1.bf16.xpose.msra.mxu0 0
    %452 = vmatprep.mubr.bf16.mxu0 0
    %453 = vmatmul.mubr.bf16.gmra.mrb[0].mxu0 %v415
    %v454 = vpop.f32.mrb[0].mxu0
    %v455 = vadd.f32 %v115, %v454
    %v456 = vpop.f32.mrb[0].mxu0
    %v457 = vpop.f32.mrb[0].mxu0
    %v458 = vpop.f32.mrb[0].mxu0
    %459 = vdwg.mxu0
    %461 = vrot.lane.b32.xlu0 %v114, 96
    %v462 = vpop.permute.xlu0 %461
    %v464 = vsel %vm119, %v114, 0
    %v467 = vsel %vm119, %v462, 0
    %469 = vmatprep.subr.bf16.mxu0 0
    %470 = vmatpush1.bf16.xpose.msra.mxu0 %v467
    %471 = vmatprep.subr.bf16.mxu0 0
    %472 = vmatpush1.bf16.xpose.msra.mxu0 0
    %473 = vmatprep.subr.bf16.mxu0 0
    %474 = vmatpush1.bf16.xpose.msra.mxu0 0
    %475 = vmatprep.subr.bf16.mxu0 0
    %476 = vmatpush1.bf16.xpose.msra.mxu0 0
    %477 = vmatprep.subr.bf16.mxu0 0
    %478 = vmatpush1.bf16.xpose.msra.mxu0 0
    %479 = vmatprep.subr.bf16.mxu0 0
    %480 = vmatpush1.bf16.xpose.msra.mxu0 0
    %481 = vmatprep.subr.bf16.mxu0 0
    %482 = vmatpush1.bf16.xpose.msra.mxu0 0
    %483 = vmatprep.subr.bf16.mxu0 0
    %484 = vmatpush1.bf16.xpose.msra.mxu0 0
    %485 = vmatprep.subr.bf16.mxu0 0
    %486 = vmatpush1.bf16.xpose.msra.mxu0 0
    %487 = vmatprep.subr.bf16.mxu0 0
    %488 = vmatpush1.bf16.xpose.msra.mxu0 0
    %489 = vmatprep.subr.bf16.mxu0 0
    %490 = vmatpush1.bf16.xpose.msra.mxu0 0
    %491 = vmatprep.subr.bf16.mxu0 0
    %492 = vmatpush1.bf16.xpose.msra.mxu0 0
    %493 = vmatprep.subr.bf16.mxu0 0
    %494 = vmatpush1.bf16.xpose.msra.mxu0 0
    %495 = vmatprep.subr.bf16.mxu0 0
    %496 = vmatpush1.bf16.xpose.msra.mxu0 0
    %497 = vmatprep.subr.bf16.mxu0 0
    %498 = vmatpush1.bf16.xpose.msra.mxu0 0
    %499 = vmatprep.subr.bf16.mxu0 0
    %500 = vmatpush1.bf16.xpose.msra.mxu0 0
    %501 = vmatprep.mubr.bf16.mxu0 0
    %502 = vmatmul.mubr.bf16.gmra.mrb[0].mxu0 %v464
    %v503 = vpop.f32.mrb[0].mxu0
    %v504 = vadd.f32 %v115, %v503
    %v505 = vpop.f32.mrb[0].mxu0
    %v506 = vpop.f32.mrb[0].mxu0
    %v507 = vpop.f32.mrb[0].mxu0
    %508 = vdwg.mxu0
    %v509 = vsel %vm119, %v161, -inf
    %510 = vmax.xlane.f32.xlu0 %v509
    %v511 = vpop.xlane.xlu0 %510
    %v512 = vsel %vm119, %v210, -inf
    %513 = vmax.xlane.f32.xlu0 %v512
    %v514 = vpop.xlane.xlu0 %513
    %v515 = vsel %vm119, %v259, -inf
    %516 = vmax.xlane.f32.xlu0 %v515
    %v517 = vpop.xlane.xlu0 %516
    %v518 = vsel %vm119, %v308, -inf
    %519 = vmax.xlane.f32.xlu0 %v518
    %v520 = vpop.xlane.xlu0 %519
    %v521 = vsel %vm119, %v357, -inf
    %522 = vmax.xlane.f32.xlu0 %v521
    %v523 = vpop.xlane.xlu0 %522
    %v524 = vsel %vm119, %v406, -inf
    %525 = vmax.xlane.f32.xlu0 %v524
    %v526 = vpop.xlane.xlu0 %525
    %v527 = vsel %vm119, %v455, -inf
    %528 = vmax.xlane.f32.xlu0 %v527
    %v529 = vpop.xlane.xlu0 %528
    %v530 = vsel %vm119, %v504, -inf
    %531 = vmax.xlane.f32.xlu0 %v530
    %v532 = vpop.xlane.xlu0 %531
    %v533 = vsub.f32 %v161, %v511
    %v534 = vsub.f32 %v210, %v514
    %v535 = vsub.f32 %v259, %v517
    %v536 = vsub.f32 %v308, %v520
    %v537 = vsub.f32 %v357, %v523
    %v538 = vsub.f32 %v406, %v526
    %v539 = vsub.f32 %v455, %v529
    %v540 = vsub.f32 %v504, %v532
    %v541 = vmul.f32 %v533, 1.442695
    %v542 = vpow.pop %v541
    %v543 = vmul.f32 %v534, 1.442695
    %v544 = vpow.pop %v543
    %v545 = vmul.f32 %v535, 1.442695
    %v546 = vpow.pop %v545
    %v547 = vmul.f32 %v536, 1.442695
    %v548 = vpow.pop %v547
    %v549 = vmul.f32 %v537, 1.442695
    %v550 = vpow.pop %v549
    %v551 = vmul.f32 %v538, 1.442695
    %v552 = vpow.pop %v551
    %v553 = vmul.f32 %v539, 1.442695
    %v554 = vpow.pop %v553
    %v555 = vmul.f32 %v540, 1.442695
    %v556 = vpow.pop %v555
    %v557 = vsel %vm119, %v542, 0.0
    %558 = vadd.xlane.f32.xlu0 %v557
    %v559 = vpop.xlane.xlu0 %558
    %v560 = vsel %vm119, %v544, 0.0
    %561 = vadd.xlane.f32.xlu0 %v560
    %v562 = vpop.xlane.xlu0 %561
    %v563 = vsel %vm119, %v546, 0.0
    %564 = vadd.xlane.f32.xlu0 %v563
    %v565 = vpop.xlane.xlu0 %564
    %v566 = vsel %vm119, %v548, 0.0
    %567 = vadd.xlane.f32.xlu0 %v566
    %v568 = vpop.xlane.xlu0 %567
    %v569 = vsel %vm119, %v550, 0.0
    %570 = vadd.xlane.f32.xlu0 %v569
    %v571 = vpop.xlane.xlu0 %570
    %v572 = vsel %vm119, %v552, 0.0
    %573 = vadd.xlane.f32.xlu0 %v572
    %v574 = vpop.xlane.xlu0 %573
    %v575 = vsel %vm119, %v554, 0.0
    %576 = vadd.xlane.f32.xlu0 %v575
    %v577 = vpop.xlane.xlu0 %576
    %v578 = vsel %vm119, %v556, 0.0
    %579 = vadd.xlane.f32.xlu0 %v578
    %v580 = vpop.xlane.xlu0 %579
    %v581 = vrcp.pop %v559
    %v582 = vrcp.pop %v562
    %v583 = vrcp.pop %v565
    %v584 = vrcp.pop %v568
    %v585 = vrcp.pop %v571
    %v586 = vrcp.pop %v574
    %v587 = vrcp.pop %v577
    %v588 = vrcp.pop %v580
    %v589 = vmul.f32 %v542, %v581
    %v590 = vmul.f32 %v544, %v582
    %v591 = vmul.f32 %v546, %v583
    %v592 = vmul.f32 %v548, %v584
    %v593 = vmul.f32 %v550, %v585
    %v594 = vmul.f32 %v552, %v586
    %v595 = vmul.f32 %v554, %v587
    %v596 = vmul.f32 %v556, %v588
    %v597 = vpack.c.bf16 %v589, %v589
    %v598 = vpack.c.bf16 %v590, %v590
    %v599 = vpack.c.bf16 %v591, %v591
    %v600 = vpack.c.bf16 %v592, %v592
    %v601 = vpack.c.bf16 %v593, %v593
    %v602 = vpack.c.bf16 %v594, %v594
    %v603 = vpack.c.bf16 %v595, %v595
    %v604 = vpack.c.bf16 %v596, %v596
    %605 = vrot.lane.b32.xlu0 %v107, 64
    %v606 = vpop.permute.xlu0 %605
    %v608 = vsel %vm119, %v597, 0
    %vm610 = vcmask 1043456
    %v612 = vsel %vm610, %v606, 0
    %614 = vmatprep.subr.bf16.mxu0 0
    %615 = vmatpush1.bf16.msra.mxu0 %v612
    %616 = vmatprep.subr.bf16.mxu0 0
    %617 = vmatpush1.bf16.msra.mxu0 0
    %618 = vmatprep.subr.bf16.mxu0 0
    %619 = vmatpush1.bf16.msra.mxu0 0
    %620 = vmatprep.subr.bf16.mxu0 0
    %621 = vmatpush1.bf16.msra.mxu0 0
    %622 = vmatprep.subr.bf16.mxu0 0
    %623 = vmatpush1.bf16.msra.mxu0 0
    %624 = vmatprep.subr.bf16.mxu0 0
    %625 = vmatpush1.bf16.msra.mxu0 0
    %626 = vmatprep.subr.bf16.mxu0 0
    %627 = vmatpush1.bf16.msra.mxu0 0
    %628 = vmatprep.subr.bf16.mxu0 0
    %629 = vmatpush1.bf16.msra.mxu0 0
    %630 = vmatprep.subr.bf16.mxu0 0
    %631 = vmatpush1.bf16.msra.mxu0 0
    %632 = vmatprep.subr.bf16.mxu0 0
    %633 = vmatpush1.bf16.msra.mxu0 0
    %634 = vmatprep.subr.bf16.mxu0 0
    %635 = vmatpush1.bf16.msra.mxu0 0
    %636 = vmatprep.subr.bf16.mxu0 0
    %637 = vmatpush1.bf16.msra.mxu0 0
    %638 = vmatprep.subr.bf16.mxu0 0
    %639 = vmatpush1.bf16.msra.mxu0 0
    %640 = vmatprep.subr.bf16.mxu0 0
    %641 = vmatpush1.bf16.msra.mxu0 0
    %642 = vmatprep.subr.bf16.mxu0 0
    %643 = vmatpush1.bf16.msra.mxu0 0
    %644 = vmatprep.subr.bf16.mxu0 0
    %645 = vmatpush1.bf16.msra.mxu0 0
    %646 = vmatprep.mubr.bf16.mxu0 0
    %647 = vmatmul.mubr.bf16.gmra.mrb[0].mxu0 %v608
    %v648 = vpop.f32.mrb[0].mxu0
    %v649 = vadd.f32 0.0, %v648
    %v650 = vpop.f32.mrb[0].mxu0
    %v651 = vpop.f32.mrb[0].mxu0
    %v652 = vpop.f32.mrb[0].mxu0
    %653 = vdwg.mxu0
    %654 = vrot.lane.b32.xlu0 %v108, 64
    %v655 = vpop.permute.xlu0 %654
    %v657 = vsel %vm119, %v598, 0
    %v660 = vsel %vm610, %v655, 0
    %662 = vmatprep.subr.bf16.mxu0 0
    %663 = vmatpush1.bf16.msra.mxu0 %v660
    %664 = vmatprep.subr.bf16.mxu0 0
    %665 = vmatpush1.bf16.msra.mxu0 0
    %666 = vmatprep.subr.bf16.mxu0 0
    %667 = vmatpush1.bf16.msra.mxu0 0
    %668 = vmatprep.subr.bf16.mxu0 0
    %669 = vmatpush1.bf16.msra.mxu0 0
    %670 = vmatprep.subr.bf16.mxu0 0
    %671 = vmatpush1.bf16.msra.mxu0 0
    %672 = vmatprep.subr.bf16.mxu0 0
    %673 = vmatpush1.bf16.msra.mxu0 0
    %674 = vmatprep.subr.bf16.mxu0 0
    %675 = vmatpush1.bf16.msra.mxu0 0
    %676 = vmatprep.subr.bf16.mxu0 0
    %677 = vmatpush1.bf16.msra.mxu0 0
    %678 = vmatprep.subr.bf16.mxu0 0
    %679 = vmatpush1.bf16.msra.mxu0 0
    %680 = vmatprep.subr.bf16.mxu0 0
    %681 = vmatpush1.bf16.msra.mxu0 0
    %682 = vmatprep.subr.bf16.mxu0 0
    %683 = vmatpush1.bf16.msra.mxu0 0
    %684 = vmatprep.subr.bf16.mxu0 0
    %685 = vmatpush1.bf16.msra.mxu0 0
    %686 = vmatprep.subr.bf16.mxu0 0
    %687 = vmatpush1.bf16.msra.mxu0 0
    %688 = vmatprep.subr.bf16.mxu0 0
    %689 = vmatpush1.bf16.msra.mxu0 0
    %690 = vmatprep.subr.bf16.mxu0 0
    %691 = vmatpush1.bf16.msra.mxu0 0
    %692 = vmatprep.subr.bf16.mxu0 0
    %693 = vmatpush1.bf16.msra.mxu0 0
    %694 = vmatprep.mubr.bf16.mxu0 0
    %695 = vmatmul.mubr.bf16.gmra.mrb[0].mxu0 %v657
    %v696 = vpop.f32.mrb[0].mxu0
    %v697 = vadd.f32 0.0, %v696
    %v698 = vpop.f32.mrb[0].mxu0
    %v699 = vpop.f32.mrb[0].mxu0
    %v700 = vpop.f32.mrb[0].mxu0
    %701 = vdwg.mxu0
    %702 = vrot.lane.b32.xlu0 %v109, 64
    %v703 = vpop.permute.xlu0 %702
    %v705 = vsel %vm119, %v599, 0
    %v708 = vsel %vm610, %v703, 0
    %710 = vmatprep.subr.bf16.mxu0 0
    %711 = vmatpush1.bf16.msra.mxu0 %v708
    %712 = vmatprep.subr.bf16.mxu0 0
    %713 = vmatpush1.bf16.msra.mxu0 0
    %714 = vmatprep.subr.bf16.mxu0 0
    %715 = vmatpush1.bf16.msra.mxu0 0
    %716 = vmatprep.subr.bf16.mxu0 0
    %717 = vmatpush1.bf16.msra.mxu0 0
    %718 = vmatprep.subr.bf16.mxu0 0
    %719 = vmatpush1.bf16.msra.mxu0 0
    %720 = vmatprep.subr.bf16.mxu0 0
    %721 = vmatpush1.bf16.msra.mxu0 0
    %722 = vmatprep.subr.bf16.mxu0 0
    %723 = vmatpush1.bf16.msra.mxu0 0
    %724 = vmatprep.subr.bf16.mxu0 0
    %725 = vmatpush1.bf16.msra.mxu0 0
    %726 = vmatprep.subr.bf16.mxu0 0
    %727 = vmatpush1.bf16.msra.mxu0 0
    %728 = vmatprep.subr.bf16.mxu0 0
    %729 = vmatpush1.bf16.msra.mxu0 0
    %730 = vmatprep.subr.bf16.mxu0 0
    %731 = vmatpush1.bf16.msra.mxu0 0
    %732 = vmatprep.subr.bf16.mxu0 0
    %733 = vmatpush1.bf16.msra.mxu0 0
    %734 = vmatprep.subr.bf16.mxu0 0
    %735 = vmatpush1.bf16.msra.mxu0 0
    %736 = vmatprep.subr.bf16.mxu0 0
    %737 = vmatpush1.bf16.msra.mxu0 0
    %738 = vmatprep.subr.bf16.mxu0 0
    %739 = vmatpush1.bf16.msra.mxu0 0
    %740 = vmatprep.subr.bf16.mxu0 0
    %741 = vmatpush1.bf16.msra.mxu0 0
    %742 = vmatprep.mubr.bf16.mxu0 0
    %743 = vmatmul.mubr.bf16.gmra.mrb[0].mxu0 %v705
    %v744 = vpop.f32.mrb[0].mxu0
    %v745 = vadd.f32 0.0, %v744
    %v746 = vpop.f32.mrb[0].mxu0
    %v747 = vpop.f32.mrb[0].mxu0
    %v748 = vpop.f32.mrb[0].mxu0
    %749 = vdwg.mxu0
    %750 = vrot.lane.b32.xlu0 %v110, 64
    %v751 = vpop.permute.xlu0 %750
    %v753 = vsel %vm119, %v600, 0
    %v756 = vsel %vm610, %v751, 0
    %758 = vmatprep.subr.bf16.mxu0 0
    %759 = vmatpush1.bf16.msra.mxu0 %v756
    %760 = vmatprep.subr.bf16.mxu0 0
    %761 = vmatpush1.bf16.msra.mxu0 0
    %762 = vmatprep.subr.bf16.mxu0 0
    %763 = vmatpush1.bf16.msra.mxu0 0
    %764 = vmatprep.subr.bf16.mxu0 0
    %765 = vmatpush1.bf16.msra.mxu0 0
    %766 = vmatprep.subr.bf16.mxu0 0
    %767 = vmatpush1.bf16.msra.mxu0 0
    %768 = vmatprep.subr.bf16.mxu0 0
    %769 = vmatpush1.bf16.msra.mxu0 0
    %770 = vmatprep.subr.bf16.mxu0 0
    %771 = vmatpush1.bf16.msra.mxu0 0
    %772 = vmatprep.subr.bf16.mxu0 0
    %773 = vmatpush1.bf16.msra.mxu0 0
    %774 = vmatprep.subr.bf16.mxu0 0
    %775 = vmatpush1.bf16.msra.mxu0 0
    %776 = vmatprep.subr.bf16.mxu0 0
    %777 = vmatpush1.bf16.msra.mxu0 0
    %778 = vmatprep.subr.bf16.mxu0 0
    %779 = vmatpush1.bf16.msra.mxu0 0
    %780 = vmatprep.subr.bf16.mxu0 0
    %781 = vmatpush1.bf16.msra.mxu0 0
    %782 = vmatprep.subr.bf16.mxu0 0
    %783 = vmatpush1.bf16.msra.mxu0 0
    %784 = vmatprep.subr.bf16.mxu0 0
    %785 = vmatpush1.bf16.msra.mxu0 0
    %786 = vmatprep.subr.bf16.mxu0 0
    %787 = vmatpush1.bf16.msra.mxu0 0
    %788 = vmatprep.subr.bf16.mxu0 0
    %789 = vmatpush1.bf16.msra.mxu0 0
    %790 = vmatprep.mubr.bf16.mxu0 0
    %791 = vmatmul.mubr.bf16.gmra.mrb[0].mxu0 %v753
    %v792 = vpop.f32.mrb[0].mxu0
    %v793 = vadd.f32 0.0, %v792
    %v794 = vpop.f32.mrb[0].mxu0
    %v795 = vpop.f32.mrb[0].mxu0
    %v796 = vpop.f32.mrb[0].mxu0
    %797 = vdwg.mxu0
    %798 = vrot.lane.b32.xlu0 %v111, 64
    %v799 = vpop.permute.xlu0 %798
    %v801 = vsel %vm119, %v601, 0
    %v804 = vsel %vm610, %v799, 0
    %806 = vmatprep.subr.bf16.mxu0 0
    %807 = vmatpush1.bf16.msra.mxu0 %v804
    %808 = vmatprep.subr.bf16.mxu0 0
    %809 = vmatpush1.bf16.msra.mxu0 0
    %810 = vmatprep.subr.bf16.mxu0 0
    %811 = vmatpush1.bf16.msra.mxu0 0
    %812 = vmatprep.subr.bf16.mxu0 0
    %813 = vmatpush1.bf16.msra.mxu0 0
    %814 = vmatprep.subr.bf16.mxu0 0
    %815 = vmatpush1.bf16.msra.mxu0 0
    %816 = vmatprep.subr.bf16.mxu0 0
    %817 = vmatpush1.bf16.msra.mxu0 0
    %818 = vmatprep.subr.bf16.mxu0 0
    %819 = vmatpush1.bf16.msra.mxu0 0
    %820 = vmatprep.subr.bf16.mxu0 0
    %821 = vmatpush1.bf16.msra.mxu0 0
    %822 = vmatprep.subr.bf16.mxu0 0
    %823 = vmatpush1.bf16.msra.mxu0 0
    %824 = vmatprep.subr.bf16.mxu0 0
    %825 = vmatpush1.bf16.msra.mxu0 0
    %826 = vmatprep.subr.bf16.mxu0 0
    %827 = vmatpush1.bf16.msra.mxu0 0
    %828 = vmatprep.subr.bf16.mxu0 0
    %829 = vmatpush1.bf16.msra.mxu0 0
    %830 = vmatprep.subr.bf16.mxu0 0
    %831 = vmatpush1.bf16.msra.mxu0 0
    %832 = vmatprep.subr.bf16.mxu0 0
    %833 = vmatpush1.bf16.msra.mxu0 0
    %834 = vmatprep.subr.bf16.mxu0 0
    %835 = vmatpush1.bf16.msra.mxu0 0
    %836 = vmatprep.subr.bf16.mxu0 0
    %837 = vmatpush1.bf16.msra.mxu0 0
    %838 = vmatprep.mubr.bf16.mxu0 0
    %839 = vmatmul.mubr.bf16.gmra.mrb[0].mxu0 %v801
    %v840 = vpop.f32.mrb[0].mxu0
    %v841 = vadd.f32 0.0, %v840
    %v842 = vpop.f32.mrb[0].mxu0
    %v843 = vpop.f32.mrb[0].mxu0
    %v844 = vpop.f32.mrb[0].mxu0
    %845 = vdwg.mxu0
    %846 = vrot.lane.b32.xlu0 %v112, 64
    %v847 = vpop.permute.xlu0 %846
    %v849 = vsel %vm119, %v602, 0
    %v852 = vsel %vm610, %v847, 0
    %854 = vmatprep.subr.bf16.mxu0 0
    %855 = vmatpush1.bf16.msra.mxu0 %v852
    %856 = vmatprep.subr.bf16.mxu0 0
    %857 = vmatpush1.bf16.msra.mxu0 0
    %858 = vmatprep.subr.bf16.mxu0 0
    %859 = vmatpush1.bf16.msra.mxu0 0
    %860 = vmatprep.subr.bf16.mxu0 0
    %861 = vmatpush1.bf16.msra.mxu0 0
    %862 = vmatprep.subr.bf16.mxu0 0
    %863 = vmatpush1.bf16.msra.mxu0 0
    %864 = vmatprep.subr.bf16.mxu0 0
    %865 = vmatpush1.bf16.msra.mxu0 0
    %866 = vmatprep.subr.bf16.mxu0 0
    %867 = vmatpush1.bf16.msra.mxu0 0
    %868 = vmatprep.subr.bf16.mxu0 0
    %869 = vmatpush1.bf16.msra.mxu0 0
    %870 = vmatprep.subr.bf16.mxu0 0
    %871 = vmatpush1.bf16.msra.mxu0 0
    %872 = vmatprep.subr.bf16.mxu0 0
    %873 = vmatpush1.bf16.msra.mxu0 0
    %874 = vmatprep.subr.bf16.mxu0 0
    %875 = vmatpush1.bf16.msra.mxu0 0
    %876 = vmatprep.subr.bf16.mxu0 0
    %877 = vmatpush1.bf16.msra.mxu0 0
    %878 = vmatprep.subr.bf16.mxu0 0
    %879 = vmatpush1.bf16.msra.mxu0 0
    %880 = vmatprep.subr.bf16.mxu0 0
    %881 = vmatpush1.bf16.msra.mxu0 0
    %882 = vmatprep.subr.bf16.mxu0 0
    %883 = vmatpush1.bf16.msra.mxu0 0
    %884 = vmatprep.subr.bf16.mxu0 0
    %885 = vmatpush1.bf16.msra.mxu0 0
    %886 = vmatprep.mubr.bf16.mxu0 0
    %887 = vmatmul.mubr.bf16.gmra.mrb[0].mxu0 %v849
    %v888 = vpop.f32.mrb[0].mxu0
    %v889 = vadd.f32 0.0, %v888
    %v890 = vpop.f32.mrb[0].mxu0
    %v891 = vpop.f32.mrb[0].mxu0
    %v892 = vpop.f32.mrb[0].mxu0
    %893 = vdwg.mxu0
    %894 = vrot.lane.b32.xlu0 %v113, 64
    %v895 = vpop.permute.xlu0 %894
    %v897 = vsel %vm119, %v603, 0
    %v900 = vsel %vm610, %v895, 0
    %902 = vmatprep.subr.bf16.mxu0 0
    %903 = vmatpush1.bf16.msra.mxu0 %v900
    %904 = vmatprep.subr.bf16.mxu0 0
    %905 = vmatpush1.bf16.msra.mxu0 0
    %906 = vmatprep.subr.bf16.mxu0 0
    %907 = vmatpush1.bf16.msra.mxu0 0
    %908 = vmatprep.subr.bf16.mxu0 0
    %909 = vmatpush1.bf16.msra.mxu0 0
    %910 = vmatprep.subr.bf16.mxu0 0
    %911 = vmatpush1.bf16.msra.mxu0 0
    %912 = vmatprep.subr.bf16.mxu0 0
    %913 = vmatpush1.bf16.msra.mxu0 0
    %914 = vmatprep.subr.bf16.mxu0 0
    %915 = vmatpush1.bf16.msra.mxu0 0
    %916 = vmatprep.subr.bf16.mxu0 0
    %917 = vmatpush1.bf16.msra.mxu0 0
    %918 = vmatprep.subr.bf16.mxu0 0
    %919 = vmatpush1.bf16.msra.mxu0 0
    %920 = vmatprep.subr.bf16.mxu0 0
    %921 = vmatpush1.bf16.msra.mxu0 0
    %922 = vmatprep.subr.bf16.mxu0 0
    %923 = vmatpush1.bf16.msra.mxu0 0
    %924 = vmatprep.subr.bf16.mxu0 0
    %925 = vmatpush1.bf16.msra.mxu0 0
    %926 = vmatprep.subr.bf16.mxu0 0
    %927 = vmatpush1.bf16.msra.mxu0 0
    %928 = vmatprep.subr.bf16.mxu0 0
    %929 = vmatpush1.bf16.msra.mxu0 0
    %930 = vmatprep.subr.bf16.mxu0 0
    %931 = vmatpush1.bf16.msra.mxu0 0
    %932 = vmatprep.subr.bf16.mxu0 0
    %933 = vmatpush1.bf16.msra.mxu0 0
    %934 = vmatprep.mubr.bf16.mxu0 0
    %935 = vmatmul.mubr.bf16.gmra.mrb[0].mxu0 %v897
    %v936 = vpop.f32.mrb[0].mxu0
    %v937 = vadd.f32 0.0, %v936
    %v938 = vpop.f32.mrb[0].mxu0
    %v939 = vpop.f32.mrb[0].mxu0
    %v940 = vpop.f32.mrb[0].mxu0
    %941 = vdwg.mxu0
    %942 = vrot.lane.b32.xlu0 %v114, 64
    %v943 = vpop.permute.xlu0 %942
    %v945 = vsel %vm119, %v604, 0
    %v948 = vsel %vm610, %v943, 0
    %950 = vmatprep.subr.bf16.mxu0 0
    %951 = vmatpush1.bf16.msra.mxu0 %v948
    %952 = vmatprep.subr.bf16.mxu0 0
    %953 = vmatpush1.bf16.msra.mxu0 0
    %954 = vmatprep.subr.bf16.mxu0 0
    %955 = vmatpush1.bf16.msra.mxu0 0
    %956 = vmatprep.subr.bf16.mxu0 0
    %957 = vmatpush1.bf16.msra.mxu0 0
    %958 = vmatprep.subr.bf16.mxu0 0
    %959 = vmatpush1.bf16.msra.mxu0 0
    %960 = vmatprep.subr.bf16.mxu0 0
    %961 = vmatpush1.bf16.msra.mxu0 0
    %962 = vmatprep.subr.bf16.mxu0 0
    %963 = vmatpush1.bf16.msra.mxu0 0
    %964 = vmatprep.subr.bf16.mxu0 0
    %965 = vmatpush1.bf16.msra.mxu0 0
    %966 = vmatprep.subr.bf16.mxu0 0
    %967 = vmatpush1.bf16.msra.mxu0 0
    %968 = vmatprep.subr.bf16.mxu0 0
    %969 = vmatpush1.bf16.msra.mxu0 0
    %970 = vmatprep.subr.bf16.mxu0 0
    %971 = vmatpush1.bf16.msra.mxu0 0
    %972 = vmatprep.subr.bf16.mxu0 0
    %973 = vmatpush1.bf16.msra.mxu0 0
    %974 = vmatprep.subr.bf16.mxu0 0
    %975 = vmatpush1.bf16.msra.mxu0 0
    %976 = vmatprep.subr.bf16.mxu0 0
    %977 = vmatpush1.bf16.msra.mxu0 0
    %978 = vmatprep.subr.bf16.mxu0 0
    %979 = vmatpush1.bf16.msra.mxu0 0
    %980 = vmatprep.subr.bf16.mxu0 0
    %981 = vmatpush1.bf16.msra.mxu0 0
    %982 = vmatprep.mubr.bf16.mxu0 0
    %983 = vmatmul.mubr.bf16.gmra.mrb[0].mxu0 %v945
    %v984 = vpop.f32.mrb[0].mxu0
    %v985 = vadd.f32 0.0, %v984
    %v986 = vpop.f32.mrb[0].mxu0
    %v987 = vpop.f32.mrb[0].mxu0
    %v988 = vpop.f32.mrb[0].mxu0
    %989 = vdwg.mxu0
    %992 = vrot.lane.b32.xlu0 %v745, 8
    %v993 = vpop.permute.xlu0 %992
    %994 = vrot.lane.b32.xlu0 %v793, 8
    %v995 = vpop.permute.xlu0 %994
    %1000 = vrot.lane.b32.xlu0 %v841, 16
    %v1001 = vpop.permute.xlu0 %1000
    %1002 = vrot.lane.b32.xlu0 %v889, 16
    %v1003 = vpop.permute.xlu0 %1002
    %1008 = vrot.lane.b32.xlu0 %v937, 24
    %v1009 = vpop.permute.xlu0 %1008
    %1010 = vrot.lane.b32.xlu0 %v985, 24
    %v1011 = vpop.permute.xlu0 %1010
    %v1014 = vsel %vm119, %v649, %v993
    %v1015 = vsel %vm119, %v697, %v995
    %vm1016 = vcmask 130048
    %v1017 = vsel %vm1016, %v1014, %v1001
    %v1018 = vsel %vm1016, %v1015, %v1003
    %vm1019 = vcmask 195584
    %v1020 = vsel %vm1019, %v1017, %v1009
    %v1021 = vsel %vm1019, %v1018, %v1011
    %v1022 = vpack.c.bf16 %v1021, %v1020
    %v1023 = vld [vmem:[%s2] sm:$0xf]
    %v1024 = vld [vmem:[%s2 + $0x4] sm:$0xf]
    %v1025 = vld [vmem:[%s2 + $0x8] sm:$0xf]
    %v1026 = vld [vmem:[%s2 + $0xc] sm:$0xf]
    %v1031 = vunpack.c.l.b16 %v1023
    %v1032 = vunpack.c.l.b16 %v1024
    %v1033 = vunpack.c.l.b16 %v1025
    %v1034 = vunpack.c.l.b16 %v1026
    %v1035 = vpack.c.b16 %v1032, %v1031
    %v1036 = vpack.c.b16 %v1034, %v1033
    %v1040 = vsel %vm42, %v1022, 0
    %1042 = vmatprep.subr.bf16.mxu0 0
    %1043 = vmatpush1.bf16.msra.mxu0 %v1035
    %1044 = vmatprep.subr.bf16.mxu0 0
    %1045 = vmatpush1.bf16.msra.mxu0 %v1036
    %1046 = vmatprep.subr.bf16.mxu0 0
    %1047 = vmatpush1.bf16.msra.mxu0 0
    %1048 = vmatprep.subr.bf16.mxu0 0
    %1049 = vmatpush1.bf16.msra.mxu0 0
    %1050 = vmatprep.subr.bf16.mxu0 0
    %1051 = vmatpush1.bf16.msra.mxu0 0
    %1052 = vmatprep.subr.bf16.mxu0 0
    %1053 = vmatpush1.bf16.msra.mxu0 0
    %1054 = vmatprep.subr.bf16.mxu0 0
    %1055 = vmatpush1.bf16.msra.mxu0 0
    %1056 = vmatprep.subr.bf16.mxu0 0
    %1057 = vmatpush1.bf16.msra.mxu0 0
    %1058 = vmatprep.subr.bf16.mxu0 0
    %1059 = vmatpush1.bf16.msra.mxu0 0
    %1060 = vmatprep.subr.bf16.mxu0 0
    %1061 = vmatpush1.bf16.msra.mxu0 0
    %1062 = vmatprep.subr.bf16.mxu0 0
    %1063 = vmatpush1.bf16.msra.mxu0 0
    %1064 = vmatprep.subr.bf16.mxu0 0
    %1065 = vmatpush1.bf16.msra.mxu0 0
    %1066 = vmatprep.subr.bf16.mxu0 0
    %1067 = vmatpush1.bf16.msra.mxu0 0
    %1068 = vmatprep.subr.bf16.mxu0 0
    %1069 = vmatpush1.bf16.msra.mxu0 0
    %1070 = vmatprep.subr.bf16.mxu0 0
    %1071 = vmatpush1.bf16.msra.mxu0 0
    %1072 = vmatprep.subr.bf16.mxu0 0
    %1073 = vmatpush1.bf16.msra.mxu0 0
    %1074 = vmatprep.mubr.bf16.mxu0 0
    %1075 = vmatmul.mubr.bf16.gmra.mrb[0].mxu0 %v1040
    %v1076 = vpop.f32.mrb[0].mxu0
    %v1077 = vadd.f32 0.0, %v1076
    %v1078 = vpop.f32.mrb[0].mxu0
    %v1079 = vpop.f32.mrb[0].mxu0
    %v1080 = vadd.f32 0.0, %v1079
    %v1081 = vpop.f32.mrb[0].mxu0
    %1082 = vdwg.mxu0
    %1083 = vst.msk [vmem:[#allocation2] sm:$0xff] %vm42, %v1077
    %1084 = vst.msk [vmem:[#allocation2 + $0x8] sm:$0xff] %vm42, %v1080
    // Predicated region
    $region18: #{self_attention_mha.1} parent=1 // pred_check
      _
    $region19: #{self_attention_mha.1} parent=1 // pred_check_branch
      %1086 = sbr.rel (0) target = $region21
    $region20: #{self_attention_mha.1} parent=1 // pred_region
      %s1088 = ssub.s32 256, 256
      %1089 = vsyncadd [#allocation3], %s1088
      %s1090 = sshll.u32 [#allocation2], 4
      %s1091 = int_to_ptr.vmem [resolvable:$true] %s1090
      %1096 = dma.vmem_to_hbm [thread:$0]  %s1091, 256, %s4, [#allocation3], 128, 128, 8
    $region21: #{self_attention_mha.1} parent=1 // pred_fallthru
      _
    // Predicated region
    $region22: #{self_attention_mha.1} parent=1 // pred_check
      _
    $region23: #{self_attention_mha.1} parent=1 // pred_check_branch
      %1098 = sbr.rel (0) target = $region25
    $region24: #{self_attention_mha.1} parent=1 // pred_region
      %1099 = dma.done [#allocation3], 256
    $region25: #{self_attention_mha.1} parent=1 // pred_fallthru
      _
    %1100 = vsyncpa [#allocation3], 1

</llo_original>
